<compile_context>
chip_gen: v7x
topology: tpu7x:2x2x1
jax: 0.10.0
libtpu: 0.0.40
codegen_flags: <defaults>
</compile_context>

<pallas_src>
import functools

import jax
import jax.numpy as jnp
from jax.experimental import pallas as pl
from jax.experimental.pallas import tpu as pltpu

_LANES = 128


def _round_up(v, m):
    return (v + m - 1) // m * m


def _fused_forward_kernel(x_ref, scale_ref, shift_ref, wband_ref, bconv_ref,
                          whead_ref, bhead_ref, out_ref, *, bt, h, wc, n_pad,
                          inv_hw):
    # x_ref:     (bt, h, wc)       raw activations, (W, C) collapsed into lanes
    # scale_ref: (1, wc) f32       per-lane 1/std      (zero on pad columns)
    # shift_ref: (1, wc) f32       per-lane -mean/std  (zero on pad columns)
    # wband_ref: (3*wc, n_pad) bf16  banded conv weight (dy blocks, Toeplitz dx)
    # bconv_ref: (1, n_pad) f32    conv bias tiled over output columns
    # whead_ref: (n_pad, nc_pad) f32  head weight tiled over output columns
    # bhead_ref: (1, nc_pad) f32
    # out_ref:   (1, bt, nc_pad)

    # Fused per-channel standardize (f32 VPU math, v5e-safe).  Pad columns are
    # forced back to zero because scale/shift are zero there, which is exactly
    # the conv's zero padding of the *standardized* input.
    xs = x_ref[...] * scale_ref[...] + shift_ref[...]            # (bt, h, wc)

    # dy = -1 / 0 / +1 row views with per-image zero rows (sublane windows).
    zrow = jnp.zeros((bt, 1, wc), xs.dtype)
    v_up = jnp.concatenate([zrow, xs[:, :h - 1, :]], axis=1)     # padded row y-1
    v_dn = jnp.concatenate([xs[:, 1:, :], zrow], axis=1)         # padded row y+1

    # Lane-aligned K concatenation (each piece is an integer number of vregs).
    # The dx taps of the 3x3 window are folded into the banded weight, so no
    # lane-sparse 9C im2col matrix is ever built.
    patches = jnp.concatenate([v_up, xs, v_dn], axis=-1)         # (bt, h, 3*wc)
    patches = patches.reshape(bt * h, 3 * wc).astype(jnp.bfloat16)

    # Conv(3x3, pad=1) + bias + ReLU as ONE unmasked bf16 MXU matmul with f32
    # accumulation.  Output column layout = (x, cout), padded to 128 lanes.
    conv = jnp.dot(patches, wband_ref[...],
                   preferred_element_type=jnp.float32)           # (bt*h, n_pad)
    conv = jnp.maximum(conv + bconv_ref[...], 0.0)

    # Global average pool: per-image sum over rows; the remaining sum over the
    # output-column (x) axis is folded into the column-tiled head weight.
    pooled = jnp.sum(conv.reshape(bt, h, n_pad), axis=1) * inv_hw  # (bt, n_pad)

    logits = jnp.dot(pooled, whead_ref[...],
                     preferred_element_type=jnp.float32) + bhead_ref[...]
    out_ref[0] = logits                                          # (bt, nc_pad)


def one_head_clustering_forward(x_nchw, params):
    """forward(x, forward_pass='default') of OneHeadClusteringModel."""
    x_nchw = x_nchw.astype(jnp.float32)
    B, C, H, W = x_nchw.shape

    w_conv = params["w_conv"].astype(jnp.float32)     # (Cout, Cin, 3, 3)
    b_conv = params["b_conv"].astype(jnp.float32)     # (Cout,)
    w_head = params["w_head"].astype(jnp.float32)     # (NC, Cout)  torch Linear
    b_head = params["b_head"].astype(jnp.float32)     # (NC,)
    t_mean = params["t_mean"].astype(jnp.float32)     # (C,)
    t_std = params["t_std"].astype(jnp.float32)       # (C,)
    cout = w_conv.shape[0]
    n_clusters = w_head.shape[0]

    # ---- lane-dense layout parameters ------------------------------------
    # Collapse (W, C) into one lane axis padded to a multiple of 128 with at
    # least one zero column, so the dx=+/-1 taps read zeros at image borders.
    w_pad = W + 1
    while (w_pad * C) % _LANES != 0:
        w_pad += 1
    wc = w_pad * C
    n_out = W * cout
    n_pad = _round_up(n_out, _LANES)
    nc_pad = _round_up(n_clusters, _LANES)

    # ---- images per grid step ---------------------------------------------
    # Whole images per step; keep >=2 steps when B>=2 so both v7x TensorCores
    # get work; cap the per-step conv intermediate at ~4 MiB of VMEM.
    cap = max(1, (4 * 1024 * 1024) // max(1, H * n_pad * 4))
    target = max(1, min(B // 2 if B >= 2 else 1, cap))
    bt = 1
    for cand in range(target, 0, -1):
        if B % cand == 0:
            bt = cand
            break
    num_steps = B // bt

    # ---- wrapper-side layout plumbing & weight prep (trace time) ----------
    x_lane = jnp.transpose(x_nchw, (0, 2, 3, 1))                  # (B,H,W,C)
    x_lane = jnp.pad(x_lane, ((0, 0), (0, 0), (0, w_pad - W), (0, 0)))
    x_lane = x_lane.reshape(B, H, wc)

    istd = 1.0 / t_std
    col_mask = jnp.repeat((jnp.arange(w_pad) < W).astype(jnp.float32), C)
    scale_row = (jnp.tile(istd, w_pad) * col_mask).reshape(1, wc)
    shift_row = (jnp.tile(-t_mean * istd, w_pad) * col_mask).reshape(1, wc)

    # Banded (block-Toeplitz) conv weight: row index = (dy, in_col, cin),
    # col index = (out_col, cout).  Entry is w_conv[cout, cin, dy, dx] iff
    # in_col == out_col + dx - 1 (conv zero-padding handled by the missing
    # left tap and the zero pad column on the right).
    kh, kw = 3, 3
    x_idx = jnp.arange(W)
    i_idx = jnp.arange(w_pad)
    q_idx = jnp.arange(kw)
    sel = (i_idx[None, :, None] ==
           (x_idx[None, None, :] + q_idx[:, None, None] - 1)).astype(jnp.float32)
    w_t = jnp.transpose(w_conv, (2, 3, 1, 0))                     # (kh,kw,C,Cout)
    band = jnp.einsum("qix,pqco->picxo", sel, w_t)                # (kh,w_pad,C,W,Cout)
    wband = band.reshape(kh * wc, n_out)
    wband = jnp.pad(wband, ((0, 0), (0, n_pad - n_out))).astype(jnp.bfloat16)

    bconv_row = jnp.tile(b_conv.reshape(1, cout), (W, 1)).reshape(1, n_out)
    bconv_row = jnp.pad(bconv_row, ((0, 0), (0, n_pad - n_out)))

    whead_big = jnp.tile(w_head.T, (W, 1))                        # (n_out, NC)
    whead_big = jnp.pad(whead_big,
                        ((0, n_pad - n_out), (0, nc_pad - n_clusters)))
    bhead_row = jnp.pad(b_head.reshape(1, n_clusters),
                        ((0, 0), (0, nc_pad - n_clusters)))

    kern = functools.partial(_fused_forward_kernel, bt=bt, h=H, wc=wc,
                             n_pad=n_pad, inv_hw=1.0 / (H * W))

    def const(shape):
        return pl.BlockSpec(shape, lambda s: (0,) * len(shape))

    flops = 2 * B * H * (3 * wc) * n_pad + 2 * B * n_pad * nc_pad
    bytes_accessed = (x_lane.size * 4 + wband.size * 2
                      + (bconv_row.size + whead_big.size + bhead_row.size) * 4
                      + (scale_row.size + shift_row.size) * 4
                      + num_steps * bt * nc_pad * 4)

    out = pl.pallas_call(
        kern,
        out_shape=jax.ShapeDtypeStruct((num_steps, bt, nc_pad), jnp.float32),
        grid=(num_steps,),
        in_specs=[
            pl.BlockSpec((bt, H, wc), lambda s: (s, 0, 0)),   # bt whole images
            const((1, wc)),             # standardize scale (lane-tiled, masked)
            const((1, wc)),             # standardize shift (lane-tiled, masked)
            const((3 * wc, n_pad)),     # banded conv weight (bf16, resident)
            const((1, n_pad)),          # conv bias (column-tiled)
            const((n_pad, nc_pad)),     # head weight (column-tiled, padded)
            const((1, nc_pad)),         # head bias (padded)
        ],
        out_specs=pl.BlockSpec((1, bt, nc_pad), lambda s: (s, 0, 0)),
        compiler_params=pltpu.CompilerParams(
            dimension_semantics=("parallel",),
            vmem_limit_bytes=32 * 1024 * 1024),
        cost_estimate=pl.CostEstimate(flops=int(flops), transcendentals=0,
                                      bytes_accessed=int(bytes_accessed)),
    )(x_lane, scale_row, shift_row, wband, bconv_row, whead_big, bhead_row)

    return out.reshape(B, nc_pad)[:, :n_clusters]


def _reference_forward(x_nchw, params):
    """Pure-JAX f32 reference of the same forward pass (for validation)."""
    mean, std = params["t_mean"], params["t_std"]
    x = (x_nchw - mean[None, :, None, None]) / std[None, :, None, None]
    y = jax.lax.conv_general_dilated(
        x, params["w_conv"], window_strides=(1, 1), padding="SAME",
        dimension_numbers=("NCHW", "OIHW", "NCHW"))
    y = jnp.maximum(y + params["b_conv"][None, :, None, None], 0.0)
    feats = jnp.mean(y, axis=(2, 3))
    return feats @ params["w_head"].T + params["b_head"]


def make_params(key, cin=4, backbone_dim=32, n_clusters=10):
    """Deterministic synthetic parameters in PyTorch layouts."""
    k1, k2, k3, k4 = jax.random.split(key, 4)
    w_conv = jax.random.normal(k1, (backbone_dim, cin, 3, 3), jnp.float32) * 0.1
    b_conv = jax.random.normal(k2, (backbone_dim,), jnp.float32) * 0.1
    w_head = jax.random.normal(k3, (n_clusters, backbone_dim), jnp.float32) * 0.1
    b_head = jax.random.normal(k4, (n_clusters,), jnp.float32) * 0.1
    t_mean = jnp.linspace(0.0, 0.3, cin, dtype=jnp.float32)
    t_std = jnp.linspace(0.5, 1.0, cin, dtype=jnp.float32)
    return {"w_conv": w_conv, "b_conv": b_conv, "w_head": w_head,
            "b_head": b_head, "t_mean": t_mean, "t_std": t_std}


if __name__ == "__main__":
    key = jax.random.PRNGKey(0)
    kx, kp = jax.random.split(key)
    x = jax.random.normal(kx, (2, 4, 16, 16), dtype=jnp.float32)
    params = make_params(kp, cin=4, backbone_dim=32, n_clusters=10)

    logits = one_head_clustering_forward(x, params)
    jax.block_until_ready(logits)
    assert logits.shape == (2, 10) and logits.dtype == jnp.float32

    ref = _reference_forward(x, params)
    max_err = float(jnp.max(jnp.abs(logits - ref)))
    assert max_err < 5e-2, f"numerical mismatch vs reference: {max_err}"
    print("KERNEL_OK")
</pallas_src>

<mosaic_0001>
module attributes {stable_mosaic.version = 11 : i64} {
  func.func @_fused_forward_kernel(%arg0: i32, %arg1: memref<1x16x128xf32, #tpu.memory_space<vmem>>, %arg2: memref<1x128xf32, #tpu.memory_space<vmem>>, %arg3: memref<1x128xf32, #tpu.memory_space<vmem>>, %arg4: memref<384x512xbf16, #tpu.memory_space<vmem>>, %arg5: memref<1x512xf32, #tpu.memory_space<vmem>>, %arg6: memref<512x128xf32, #tpu.memory_space<vmem>>, %arg7: memref<1x128xf32, #tpu.memory_space<vmem>>, %arg8: memref<1x1x128xf32, #tpu.memory_space<vmem>>) attributes {dimension_semantics = [#tpu.dimension_semantics<parallel>], iteration_bounds = array<i64: 2>, scalar_prefetch = 0 : i64, scratch_operands = 0 : i64, tpu.core_type = #tpu.core_type<tc>, window_params = [{transform_indices = @transform_0, window_bounds = array<i64: 1, 16, 128>}, {pipeline_mode = #tpu.pipeline_mode<synchronous>, transform_indices = @transform_1, window_bounds = array<i64: 1, 128>}, {pipeline_mode = #tpu.pipeline_mode<synchronous>, transform_indices = @transform_2, window_bounds = array<i64: 1, 128>}, {pipeline_mode = #tpu.pipeline_mode<synchronous>, transform_indices = @transform_3, window_bounds = array<i64: 384, 512>}, {pipeline_mode = #tpu.pipeline_mode<synchronous>, transform_indices = @transform_4, window_bounds = array<i64: 1, 512>}, {pipeline_mode = #tpu.pipeline_mode<synchronous>, transform_indices = @transform_5, window_bounds = array<i64: 512, 128>}, {pipeline_mode = #tpu.pipeline_mode<synchronous>, transform_indices = @transform_6, window_bounds = array<i64: 1, 128>}, {transform_indices = @transform_7, window_bounds = array<i64: 1, 1, 128>}]} {
    %c0 = arith.constant 0 : index
    %c0_0 = arith.constant 0 : index
    %c0_1 = arith.constant 0 : index
    %0 = vector.load %arg1[%c0, %c0_0, %c0_1] : memref<1x16x128xf32, #tpu.memory_space<vmem>>, vector<1x16x128xf32>
    %c0_2 = arith.constant 0 : index
    %c0_3 = arith.constant 0 : index
    %1 = vector.load %arg2[%c0_2, %c0_3] : memref<1x128xf32, #tpu.memory_space<vmem>>, vector<1x128xf32>
    %2 = vector.shape_cast %1 : vector<1x128xf32> to vector<1x1x128xf32>
    %3 = vector.broadcast %2 : vector<1x1x128xf32> to vector<1x16x128xf32>
    %4 = arith.mulf %0, %3 : vector<1x16x128xf32>
    %c0_4 = arith.constant 0 : index
    %c0_5 = arith.constant 0 : index
    %5 = vector.load %arg3[%c0_4, %c0_5] : memref<1x128xf32, #tpu.memory_space<vmem>>, vector<1x128xf32>
    %6 = vector.shape_cast %5 : vector<1x128xf32> to vector<1x1x128xf32>
    %7 = vector.broadcast %6 : vector<1x1x128xf32> to vector<1x16x128xf32>
    %8 = arith.addf %4, %7 : vector<1x16x128xf32>
    %cst = arith.constant 0.000000e+00 : f32
    %9 = vector.broadcast %cst : f32 to vector<1x1x128xf32>
    %10 = vector.extract_strided_slice %8 {offsets = [0, 0, 0], sizes = [1, 15, 128], strides = [1, 1, 1]} : vector<1x16x128xf32> to vector<1x15x128xf32>
    %11 = tpu.concatenate %9, %10 in 1 : vector<1x1x128xf32>, vector<1x15x128xf32> -> vector<1x16x128xf32>
    %12 = vector.extract_strided_slice %8 {offsets = [0, 1, 0], sizes = [1, 15, 128], strides = [1, 1, 1]} : vector<1x16x128xf32> to vector<1x15x128xf32>
    %13 = tpu.concatenate %12, %9 in 1 : vector<1x15x128xf32>, vector<1x1x128xf32> -> vector<1x16x128xf32>
    %14 = tpu.concatenate %11, %8, %13 in 2 : vector<1x16x128xf32>, vector<1x16x128xf32>, vector<1x16x128xf32> -> vector<1x16x384xf32>
    %15 = vector.shape_cast %14 : vector<1x16x384xf32> to vector<16x384xf32>
    %16 = arith.truncf %15 : vector<16x384xf32> to vector<16x384xbf16>
    %c0_6 = arith.constant 0 : index
    %c0_7 = arith.constant 0 : index
    %17 = vector.load %arg4[%c0_6, %c0_7] : memref<384x512xbf16, #tpu.memory_space<vmem>>, vector<384x512xbf16>
    %cst_8 = arith.constant dense<0.000000e+00> : vector<16x512xf32>
    %18 = tpu.matmul %16, %17, %cst_8 {dimension_numbers = #tpu.dot_dimension_numbers<[1], [0], [0], [1], [0, 0, 1, 1], [], []>} : vector<16x384xbf16>, vector<384x512xbf16>, vector<16x512xf32> -> vector<16x512xf32>
    %c0_9 = arith.constant 0 : index
    %c0_10 = arith.constant 0 : index
    %19 = vector.load %arg5[%c0_9, %c0_10] : memref<1x512xf32, #tpu.memory_space<vmem>>, vector<1x512xf32>
    %20 = vector.broadcast %19 : vector<1x512xf32> to vector<16x512xf32>
    %21 = arith.addf %18, %20 : vector<16x512xf32>
    %cst_11 = arith.constant 0.000000e+00 : f32
    %22 = vector.broadcast %cst_11 : f32 to vector<16x512xf32>
    %23 = arith.maximumf %21, %22 : vector<16x512xf32>
    %24 = vector.shape_cast %23 : vector<16x512xf32> to vector<1x16x512xf32>
    %cst_12 = arith.constant dense<0.000000e+00> : vector<1x512xf32>
    %25 = vector.multi_reduction <add>, %24, %cst_12 [1] : vector<1x16x512xf32> to vector<1x512xf32>
    %cst_13 = arith.constant 3.906250e-03 : f32
    %26 = vector.broadcast %cst_13 : f32 to vector<1x512xf32>
    %27 = arith.mulf %25, %26 : vector<1x512xf32>
    %c0_14 = arith.constant 0 : index
    %c0_15 = arith.constant 0 : index
    %28 = vector.load %arg6[%c0_14, %c0_15] : memref<512x128xf32, #tpu.memory_space<vmem>>, vector<512x128xf32>
    %cst_16 = arith.constant dense<0.000000e+00> : vector<1x128xf32>
    %29 = tpu.matmul %27, %28, %cst_16 {dimension_numbers = #tpu.dot_dimension_numbers<[1], [0], [0], [1], [0, 0, 1, 1], [], []>} : vector<1x512xf32>, vector<512x128xf32>, vector<1x128xf32> -> vector<1x128xf32>
    %c0_17 = arith.constant 0 : index
    %c0_18 = arith.constant 0 : index
    %30 = vector.load %arg7[%c0_17, %c0_18] : memref<1x128xf32, #tpu.memory_space<vmem>>, vector<1x128xf32>
    %31 = arith.addf %29, %30 : vector<1x128xf32>
    %c0_19 = arith.constant 0 : index
    %c0_20 = arith.constant 0 : index
    %c0_21 = arith.constant 0 : index
    %32 = vector.load %arg8[%c0_19, %c0_20, %c0_21] : memref<1x1x128xf32, #tpu.memory_space<vmem>>, vector<1x1x128xf32>
    %33 = vector.shape_cast %32 : vector<1x1x128xf32> to vector<1x128xf32>
    %34 = vector.shape_cast %31 : vector<1x128xf32> to vector<1x1x128xf32>
    tpu.vector_store %arg8[%c0_19, %c0_20, %c0_21], %34 {strides = array<i32>} : memref<1x1x128xf32, #tpu.memory_space<vmem>>, vector<1x1x128xf32>,
    return
  }
  func.func @transform_0(%arg0: i32) -> (i32, i32, i32) {
    %c0_i32 = arith.constant 0 : i32
    %c0_i32_0 = arith.constant 0 : i32
    %c0_i32_1 = arith.constant 0 : i32
    return %arg0, %c0_i32, %c0_i32_0 : i32, i32, i32
  }
  func.func @transform_1(%arg0: i32) -> (i32, i32) {
    %c0_i32 = arith.constant 0 : i32
    %c0_i32_0 = arith.constant 0 : i32
    %c0_i32_1 = arith.constant 0 : i32
    return %c0_i32, %c0_i32_0 : i32, i32
  }
  func.func @transform_2(%arg0: i32) -> (i32, i32) {
    %c0_i32 = arith.constant 0 : i32
    %c0_i32_0 = arith.constant 0 : i32
    %c0_i32_1 = arith.constant 0 : i32
    return %c0_i32, %c0_i32_0 : i32, i32
  }
  func.func @transform_3(%arg0: i32) -> (i32, i32) {
    %c0_i32 = arith.constant 0 : i32
    %c0_i32_0 = arith.constant 0 : i32
    %c0_i32_1 = arith.constant 0 : i32
    return %c0_i32, %c0_i32_0 : i32, i32
  }
  func.func @transform_4(%arg0: i32) -> (i32, i32) {
    %c0_i32 = arith.constant 0 : i32
    %c0_i32_0 = arith.constant 0 : i32
    %c0_i32_1 = arith.constant 0 : i32
    return %c0_i32, %c0_i32_0 : i32, i32
  }
  func.func @transform_5(%arg0: i32) -> (i32, i32) {
    %c0_i32 = arith.constant 0 : i32
    %c0_i32_0 = arith.constant 0 : i32
    %c0_i32_1 = arith.constant 0 : i32
    return %c0_i32, %c0_i32_0 : i32, i32
  }
  func.func @transform_6(%arg0: i32) -> (i32, i32) {
    %c0_i32 = arith.constant 0 : i32
    %c0_i32_0 = arith.constant 0 : i32
    %c0_i32_1 = arith.constant 0 : i32
    return %c0_i32, %c0_i32_0 : i32, i32
  }
  func.func @transform_7(%arg0: i32) -> (i32, i32, i32) {
    %c0_i32 = arith.constant 0 : i32
    %c0_i32_0 = arith.constant 0 : i32
    %c0_i32_1 = arith.constant 0 : i32
    return %arg0, %c0_i32, %c0_i32_0 : i32, i32, i32
  }
}

</mosaic_0001>

<llo_original>
// kernel: tpu_custom_call.1
$region0: #{tpu_custom_call.1}
  #allocation0 [shape = 'u32[]', space=smem, size = 0x4, offset = 0x4, fixed_abs, tag = 'smem constant byte address 0x4 - core index']
  #allocation1 [shape = 'u32[144,128]{1,0:T(1,128)}', space=vmem, size = 0x12000, scoped, tag = 'internal scratch']
  %s0 = inlined_call_operand.hbm [shape: f32[2,16,128], index: 0, kind: input, shape index: {}]
  %s1 = inlined_call_operand.vmem [shape: f32[1,128], index: 1, kind: input, shape index: {}]
  %s2 = inlined_call_operand.vmem [shape: f32[1,128], index: 2, kind: input, shape index: {}]
  %s3 = inlined_call_operand.hbm [shape: bf16[384,512], index: 3, kind: input, shape index: {}]
  %s4 = inlined_call_operand.vmem [shape: f32[1,512], index: 4, kind: input, shape index: {}]
  %s5 = inlined_call_operand.hbm [shape: f32[512,128], index: 5, kind: input, shape index: {}]
  %s6 = inlined_call_operand.vmem [shape: f32[1,128], index: 6, kind: input, shape index: {}]
  %s7 = inlined_call_operand.hbm [shape: f32[2,1,128], index: 7, kind: output, shape index: {}]
  %s8 = sld [smem:[#allocation0]]
  $region73: #{tpu_custom_call.1} parent=0
    _
  %s10 = ssub.s32 1, %s8
  %s11 = scalar_select 0, %s10, %s8
  $region1: #{tpu_custom_call.1} parent=0
    #allocation2 [shape = 'u8[16384]{0}', space=vmem, size = 0x4000, scoped, tag = 'input window, operand 0']
    #allocation3 [shape = 's32[2]{0}', space=sflag, size = 0x8, scoped, tag = 'scoped memory for tpu_custom_call.1']
    #allocation4 [shape = 's32[2]{0}', space=sflag, size = 0x8, scoped, tag = 'scoped memory for tpu_custom_call.1']
    #allocation5 [shape = 'u8[393216]{0}', space=vmem, size = 0x60000, scoped, tag = 'input window, operand 3, single buffered']
    #allocation6 [shape = 's32[1]{0}', space=sflag, size = 0x4, scoped, tag = 'scoped memory for tpu_custom_call.1']
    #allocation7 [shape = 'u8[262144]{0}', space=vmem, size = 0x40000, scoped, tag = 'input window, operand 5, single buffered']
    #allocation8 [shape = 'u8[1024]{0}', space=vmem, size = 0x400, scoped, tag = 'output window, operand 0']
    %12 = vsyncpa [#allocation3], 0
    %s13 = scalar_lea.sflag [#allocation3], 1
    %14 = vsyncpa %s13, 0
    %15 = vsyncpa [#allocation6], 0
    %16 = vsyncpa [#allocation4], 0
    %s17 = scalar_lea.sflag [#allocation4], 1
    %18 = vsyncpa %s17, 0
    loop: start=0, step=1, limit=4
    $region2: #{tpu_custom_call.1} parent=1 // loop_pre_header
      _
    $region3: #{tpu_custom_call.1} parent=1 // loop_header
      %s20 = sphi 0, %s24
      %p21 = scmp.ge.s32.totalorder %s20, 4
      %s30 = sphi 0, %s32
      %s33 = sphi 0, %s30
      %s34 = sphi 0, %s33
      %s50 = sphi 0, %s34
      %s54 = sphi 0, %s54
      %s56 = sphi 0, %s54
      %s57 = sphi 0, %s56
      %s71 = sphi 0, %s57
      %s75 = sphi 0, %s75
      %s77 = sphi 0, %s75
      %s78 = sphi 0, %s77
      %s92 = sphi 0, %s78
      %s96 = sphi 0, %s96
      %s98 = sphi 0, %s96
      %s99 = sphi 0, %s98
      %s113 = sphi 0, %s99
      %s117 = sphi 0, %s117
      %s119 = sphi 0, %s117
      %s120 = sphi 0, %s119
      %s134 = sphi 0, %s120
      %s138 = sphi 0, %s138
      %s140 = sphi 0, %s138
      %s141 = sphi 0, %s140
      %s155 = sphi 0, %s141
      %s159 = sphi 0, %s159
      %s161 = sphi 0, %s159
      %s162 = sphi 0, %s161
      %s176 = sphi 0, %s162
      %s182 = sphi 0, %s184
      %s185 = sphi 0, %s182
      %s186 = sphi 0, %s185
      %s202 = sphi 0, %s186
    $region4: #{tpu_custom_call.1} parent=1 // loop_header_branch
      %23 = sbr.rel (%p21) target = $region8
    $region5: #{tpu_custom_call.1} parent=1 // loop_body
      %s25 = ssub.s32 %s20, 1
      %s26 = ssub.s32 %s20, 2
      %s27 = sadd.s32 %s20, 1
      %s28 = ssub.s32 %s20, %s27
      %p29 = scmp.eq.s32.totalorder %s28, 0
      %s31 = sadd.s32 %s30, 1
      %s32 = scalar_select %p29, %s30, %s31
      %p35 = pneg %p29
      %p36 = scmp.eq.s32.totalorder %s20, 1
      %p37 = por %p35, %p36
      %p38 = scmp.ne.s32.totalorder %s30, %s33
      %p39 = scmp.eq.s32.totalorder %s20, 0
      %p40 = por %p38, %p39
      %p41 = scmp.ne.s32.totalorder %s30, %s33
      %p42 = scmp.eq.s32.totalorder %s25, 1
      %p43 = por %p41, %p42
      %p44 = scmp.ne.s32.totalorder %s33, %s34
      %p45 = scmp.eq.s32.totalorder %s25, 0
      %p46 = por %p44, %p45
      %p47 = scmp.ne.s32.totalorder %s33, %s34
      %p48 = scmp.eq.s32.totalorder %s26, 1
      %p49 = por %p47, %p48
      %p51 = scmp.ne.s32.totalorder %s34, %s50
      %p52 = scmp.eq.s32.totalorder %s26, 0
      %p53 = por %p51, %p52
      %s55 = sadd.s32 %s54, 1
      %p58 = scmp.eq.s32.totalorder %s20, 1
      %p59 = scmp.ne.s32.totalorder %s54, %s56
      %p60 = scmp.eq.s32.totalorder %s20, 0
      %p61 = por %p59, %p60
      %p62 = scmp.ne.s32.totalorder %s54, %s56
      %p63 = scmp.eq.s32.totalorder %s25, 1
      %p64 = por %p62, %p63
      %p65 = scmp.ne.s32.totalorder %s56, %s57
      %p66 = scmp.eq.s32.totalorder %s25, 0
      %p67 = por %p65, %p66
      %p68 = scmp.ne.s32.totalorder %s56, %s57
      %p69 = scmp.eq.s32.totalorder %s26, 1
      %p70 = por %p68, %p69
      %p72 = scmp.ne.s32.totalorder %s57, %s71
      %p73 = scmp.eq.s32.totalorder %s26, 0
      %p74 = por %p72, %p73
      %s76 = sadd.s32 %s75, 1
      %p79 = scmp.eq.s32.totalorder %s20, 1
      %p80 = scmp.ne.s32.totalorder %s75, %s77
      %p81 = scmp.eq.s32.totalorder %s20, 0
      %p82 = por %p80, %p81
      %p83 = scmp.ne.s32.totalorder %s75, %s77
      %p84 = scmp.eq.s32.totalorder %s25, 1
      %p85 = por %p83, %p84
      %p86 = scmp.ne.s32.totalorder %s77, %s78
      %p87 = scmp.eq.s32.totalorder %s25, 0
      %p88 = por %p86, %p87
      %p89 = scmp.ne.s32.totalorder %s77, %s78
      %p90 = scmp.eq.s32.totalorder %s26, 1
      %p91 = por %p89, %p90
      %p93 = scmp.ne.s32.totalorder %s78, %s92
      %p94 = scmp.eq.s32.totalorder %s26, 0
      %p95 = por %p93, %p94
      %s97 = sadd.s32 %s96, 1
      %p100 = scmp.eq.s32.totalorder %s20, 1
      %p101 = scmp.ne.s32.totalorder %s96, %s98
      %p102 = scmp.eq.s32.totalorder %s20, 0
      %p103 = por %p101, %p102
      %p104 = scmp.ne.s32.totalorder %s96, %s98
      %p105 = scmp.eq.s32.totalorder %s25, 1
      %p106 = por %p104, %p105
      %p107 = scmp.ne.s32.totalorder %s98, %s99
      %p108 = scmp.eq.s32.totalorder %s25, 0
      %p109 = por %p107, %p108
      %p110 = scmp.ne.s32.totalorder %s98, %s99
      %p111 = scmp.eq.s32.totalorder %s26, 1
      %p112 = por %p110, %p111
      %p114 = scmp.ne.s32.totalorder %s99, %s113
      %p115 = scmp.eq.s32.totalorder %s26, 0
      %p116 = por %p114, %p115
      %s118 = sadd.s32 %s117, 1
      %p121 = scmp.eq.s32.totalorder %s20, 1
      %p122 = scmp.ne.s32.totalorder %s117, %s119
      %p123 = scmp.eq.s32.totalorder %s20, 0
      %p124 = por %p122, %p123
      %p125 = scmp.ne.s32.totalorder %s117, %s119
      %p126 = scmp.eq.s32.totalorder %s25, 1
      %p127 = por %p125, %p126
      %p128 = scmp.ne.s32.totalorder %s119, %s120
      %p129 = scmp.eq.s32.totalorder %s25, 0
      %p130 = por %p128, %p129
      %p131 = scmp.ne.s32.totalorder %s119, %s120
      %p132 = scmp.eq.s32.totalorder %s26, 1
      %p133 = por %p131, %p132
      %p135 = scmp.ne.s32.totalorder %s120, %s134
      %p136 = scmp.eq.s32.totalorder %s26, 0
      %p137 = por %p135, %p136
      %s139 = sadd.s32 %s138, 1
      %p142 = scmp.eq.s32.totalorder %s20, 1
      %p143 = scmp.ne.s32.totalorder %s138, %s140
      %p144 = scmp.eq.s32.totalorder %s20, 0
      %p145 = por %p143, %p144
      %p146 = scmp.ne.s32.totalorder %s138, %s140
      %p147 = scmp.eq.s32.totalorder %s25, 1
      %p148 = por %p146, %p147
      %p149 = scmp.ne.s32.totalorder %s140, %s141
      %p150 = scmp.eq.s32.totalorder %s25, 0
      %p151 = por %p149, %p150
      %p152 = scmp.ne.s32.totalorder %s140, %s141
      %p153 = scmp.eq.s32.totalorder %s26, 1
      %p154 = por %p152, %p153
      %p156 = scmp.ne.s32.totalorder %s141, %s155
      %p157 = scmp.eq.s32.totalorder %s26, 0
      %p158 = por %p156, %p157
      %s160 = sadd.s32 %s159, 1
      %p163 = scmp.eq.s32.totalorder %s20, 1
      %p164 = scmp.ne.s32.totalorder %s159, %s161
      %p165 = scmp.eq.s32.totalorder %s20, 0
      %p166 = por %p164, %p165
      %p167 = scmp.ne.s32.totalorder %s159, %s161
      %p168 = scmp.eq.s32.totalorder %s25, 1
      %p169 = por %p167, %p168
      %p170 = scmp.ne.s32.totalorder %s161, %s162
      %p171 = scmp.eq.s32.totalorder %s25, 0
      %p172 = por %p170, %p171
      %p173 = scmp.ne.s32.totalorder %s161, %s162
      %p174 = scmp.eq.s32.totalorder %s26, 1
      %p175 = por %p173, %p174
      %p177 = scmp.ne.s32.totalorder %s162, %s176
      %p178 = scmp.eq.s32.totalorder %s26, 0
      %p179 = por %p177, %p178
      %s180 = ssub.s32 %s20, %s27
      %p181 = scmp.eq.s32.totalorder %s180, 0
      %s183 = sadd.s32 %s182, 1
      %s184 = scalar_select %p181, %s182, %s183
      %p187 = pneg %p181
      %p188 = scmp.eq.s32.totalorder %s20, 1
      %p189 = por %p187, %p188
      %p190 = scmp.ne.s32.totalorder %s182, %s185
      %p191 = scmp.eq.s32.totalorder %s20, 0
      %p192 = por %p190, %p191
      %p193 = scmp.ne.s32.totalorder %s182, %s185
      %p194 = scmp.eq.s32.totalorder %s25, 1
      %p195 = por %p193, %p194
      %p196 = scmp.ne.s32.totalorder %s185, %s186
      %p197 = scmp.eq.s32.totalorder %s25, 0
      %p198 = por %p196, %p197
      %p199 = scmp.ne.s32.totalorder %s185, %s186
      %p200 = scmp.eq.s32.totalorder %s26, 1
      %p201 = por %p199, %p200
      %p203 = scmp.ne.s32.totalorder %s186, %s202
      %p204 = scmp.eq.s32.totalorder %s26, 0
      %p205 = por %p203, %p204
      %p206 = scmp.le.s32.totalorder 1, %s20
      %p207 = scmp.lt.s32.totalorder %s20, 3
      %p208 = pnand %p206, %p207
      %p209 = pneg %p208
      // Predicated region
      $region9: #{tpu_custom_call.1} parent=5 // pred_check
        _
      $region10: #{tpu_custom_call.1} parent=5 // pred_check_branch
        %211 = sbr.rel (%p208) target = $region12
      $region11: #{tpu_custom_call.1} parent=5 // pred_region
        %s212 = ssub.s32 %s20, 1
        // Predicated region
        $region13: #{tpu_custom_call.1} parent=11 // pred_check
          %p213 = pneg %p67
        $region14: #{tpu_custom_call.1} parent=11 // pred_check_branch
          %215 = sbr.rel (%p213) target = $region16
        $region15: #{tpu_custom_call.1} parent=11 // pred_region
          _
        $region16: #{tpu_custom_call.1} parent=11 // pred_fallthru
          _
        // Predicated region
        $region17: #{tpu_custom_call.1} parent=11 // pred_check
          %p216 = pneg %p88
        $region18: #{tpu_custom_call.1} parent=11 // pred_check_branch
          %218 = sbr.rel (%p216) target = $region20
        $region19: #{tpu_custom_call.1} parent=11 // pred_region
          _
        $region20: #{tpu_custom_call.1} parent=11 // pred_fallthru
          _
        // Predicated region
        $region21: #{tpu_custom_call.1} parent=11 // pred_check
          %p219 = pneg %p109
        $region22: #{tpu_custom_call.1} parent=11 // pred_check_branch
          %221 = sbr.rel (%p219) target = $region24
        $region23: #{tpu_custom_call.1} parent=11 // pred_region
          %s223 = ssub.s32 12288, 12288
          %224 = vsyncadd [#allocation6], %s223
          %s225 = sshll.u32 [#allocation5], 4
          %s226 = int_to_ptr.vmem [resolvable:$true] %s225
          %231 = dma.hbm_to_vmem [thread:$0]  %s3, 12288, %s226, [#allocation6], 256, 256, 16
        $region24: #{tpu_custom_call.1} parent=11 // pred_fallthru
          _
        // Predicated region
        $region25: #{tpu_custom_call.1} parent=11 // pred_check
          %p232 = pneg %p130
        $region26: #{tpu_custom_call.1} parent=11 // pred_check_branch
          %234 = sbr.rel (%p232) target = $region28
        $region27: #{tpu_custom_call.1} parent=11 // pred_region
          _
        $region28: #{tpu_custom_call.1} parent=11 // pred_fallthru
          _
        // Predicated region
        $region29: #{tpu_custom_call.1} parent=11 // pred_check
          %p235 = pneg %p151
        $region30: #{tpu_custom_call.1} parent=11 // pred_check_branch
          %237 = sbr.rel (%p235) target = $region32
        $region31: #{tpu_custom_call.1} parent=11 // pred_region
          %s239 = ssub.s32 8192, 8192
          %240 = vsyncadd [#allocation6], %s239
          %s241 = sshll.u32 [#allocation7], 4
          %s242 = int_to_ptr.vmem [resolvable:$true] %s241
          %247 = dma.hbm_to_vmem [thread:$0]  %s5, 8192, %s242, [#allocation6], 128, 128, 8
        $region32: #{tpu_custom_call.1} parent=11 // pred_fallthru
          _
        // Predicated region
        $region33: #{tpu_custom_call.1} parent=11 // pred_check
          %p248 = pneg %p172
        $region34: #{tpu_custom_call.1} parent=11 // pred_check_branch
          %250 = sbr.rel (%p248) target = $region36
        $region35: #{tpu_custom_call.1} parent=11 // pred_region
          _
        $region36: #{tpu_custom_call.1} parent=11 // pred_fallthru
          _
      $region12: #{tpu_custom_call.1} parent=5 // pred_fallthru
        _
      %p251 = scmp.lt.s32.totalorder %s20, 2
      // Predicated region
      $region37: #{tpu_custom_call.1} parent=5 // pred_check
        %p252 = pneg %p251
      $region38: #{tpu_custom_call.1} parent=5 // pred_check_branch
        %254 = sbr.rel (%p252) target = $region40
      $region39: #{tpu_custom_call.1} parent=5 // pred_region
        // Predicated region
        $region41: #{tpu_custom_call.1} parent=39 // pred_check
          %p255 = pneg %p40
        $region42: #{tpu_custom_call.1} parent=39 // pred_check_branch
          %257 = sbr.rel (%p255) target = $region44
        $region43: #{tpu_custom_call.1} parent=39 // pred_region
          %s258 = sand.u32 %s30, 1
          %s259 = scalar_lea.sflag [#allocation3], %s258
          %s260 = sand.u32 %s30, 1
          %s261 = smul.addr %s260, 16
          %s262 = scalar_lea.vmem [#allocation2], %s261
          %s264 = ssub.s32 256, 256
          %265 = vsyncadd %s259, %s264
          %s266 = smul.addr %s20, 2
          %s267 = smul.addr %s266, 128
          %s268 = scalar_lea.hbm %s0, %s267
          %s269 = sshll.u32 %s262, 4
          %s270 = int_to_ptr.vmem [resolvable:$true] %s269
          %275 = dma.hbm_to_vmem [thread:$0]  %s268, 256, %s270, %s259, 128, 128, 8
        $region44: #{tpu_custom_call.1} parent=39 // pred_fallthru
          _
      $region40: #{tpu_custom_call.1} parent=5 // pred_fallthru
        _
      %p276 = scmp.le.s32.totalorder 1, %s20
      %p277 = scmp.lt.s32.totalorder %s20, 3
      %p278 = pnand %p276, %p277
      %p279 = pneg %p278
      // Predicated region
      $region45: #{tpu_custom_call.1} parent=5 // pred_check
        _
      $region46: #{tpu_custom_call.1} parent=5 // pred_check_branch
        %281 = sbr.rel (%p278) target = $region48
      $region47: #{tpu_custom_call.1} parent=5 // pred_region
        %s282 = ssub.s32 %s20, 1
        %s283 = sand.u32 %s33, 1
        %s284 = scalar_lea.sflag [#allocation3], %s283
        %s285 = sand.u32 %s33, 1
        %s286 = smul.addr %s285, 16
        %s287 = scalar_lea.vmem [#allocation2], %s286
        // Predicated region
        $region49: #{tpu_custom_call.1} parent=47 // pred_check
          %p288 = pneg %p46
        $region50: #{tpu_custom_call.1} parent=47 // pred_check_branch
          %290 = sbr.rel (%p288) target = $region52
        $region51: #{tpu_custom_call.1} parent=47 // pred_region
          %291 = dma.done %s284, 256
        $region52: #{tpu_custom_call.1} parent=47 // pred_fallthru
          _
        // Predicated region
        $region53: #{tpu_custom_call.1} parent=47 // pred_check
          %p292 = pneg %p109
        $region54: #{tpu_custom_call.1} parent=47 // pred_check_branch
          %294 = sbr.rel (%p292) target = $region56
        $region55: #{tpu_custom_call.1} parent=47 // pred_region
          %295 = dma.done [#allocation6], 12288
        $region56: #{tpu_custom_call.1} parent=47 // pred_fallthru
          _
        // Predicated region
        $region57: #{tpu_custom_call.1} parent=47 // pred_check
          %p296 = pneg %p151
        $region58: #{tpu_custom_call.1} parent=47 // pred_check_branch
          %298 = sbr.rel (%p296) target = $region60
        $region59: #{tpu_custom_call.1} parent=47 // pred_region
          %299 = dma.done [#allocation6], 8192
        $region60: #{tpu_custom_call.1} parent=47 // pred_fallthru
          _
        %s300 = sand.u32 %s33, 1
        %s301 = scalar_lea.sflag [#allocation3], %s300
        %s302 = sand.u32 %s33, 1
        %s303 = smul.addr %s302, 16
        %s304 = scalar_lea.vmem [#allocation2], %s303
        %p305 = pneg %p46
        %p306 = pneg %p43
        %p307 = pneg %p67
        %p308 = pneg %p64
        %p309 = pneg %p88
        %p310 = pneg %p85
        %p311 = pneg %p109
        %p312 = pneg %p106
        %p313 = pneg %p130
        %p314 = pneg %p127
        %p315 = pneg %p151
        %p316 = pneg %p148
        %p317 = pneg %p172
        %p318 = pneg %p169
        %p319 = pneg %p198
        %p320 = pneg %p195
        %s321 = sand.u32 %s185, 1
        %s322 = scalar_lea.sflag [#allocation4], %s321
        %s323 = sand.u32 %s185, 1
        %s324 = scalar_lea.vmem [#allocation8], %s323
        %v326 = vld [vmem:[%s287] sm:$0xff]
        %v327 = vld [vmem:[%s287 + $0x8] sm:$0xff]
        %v328 = vld [vmem:[%s1] sm:$0x1]
        %v330 = vlaneseq
        %v331 = vshrl.u32 %v330, 7
        %v332 = vsub.s32 0, %v331
        %v333 = vrot.slane %v328, %v332
        %v335 = vmul.f32 %v326, %v333
        %v336 = vmul.f32 %v327, %v333
        %v337 = vld [vmem:[%s2] sm:$0x1]
        %v339 = vlaneseq
        %v340 = vshrl.u32 %v339, 7
        %v341 = vsub.s32 0, %v340
        %v342 = vrot.slane %v337, %v341
        %v344 = vadd.f32 %v335, %v342
        %v345 = vadd.f32 %v336, %v342
        %vm348 = vcmask 1040384
        %v349 = vrot.slane %v344, 7
        %v350 = vrot.slane %v345, 7
        %v351 = vsel %vm348, %v349, %v350
        %v354 = vsel %vm348, 0.0, %v349
        %vm355 = vcmask 1046528
        %v356 = vrot.slane %v344, 1
        %v357 = vrot.slane %v345, 1
        %v358 = vsel %vm355, %v356, %v357
        %v361 = vsel %vm355, %v357, 0.0
        %v362 = vpack.c.bf16 %v351, %v354
        %v363 = vpack.c.bf16 %v345, %v344
        %v364 = vpack.c.bf16 %v361, %v358
        %v365 = vld [vmem:[#allocation5] sm:$0xff]
        %v366 = vld [vmem:[#allocation5 + $0x8] sm:$0xff]
        %v367 = vld [vmem:[#allocation5 + $0x10] sm:$0xff]
        %v368 = vld [vmem:[#allocation5 + $0x18] sm:$0xff]
        %v369 = vld [vmem:[#allocation5 + $0x20] sm:$0xff]
        %v370 = vld [vmem:[#allocation5 + $0x28] sm:$0xff]
        %v371 = vld [vmem:[#allocation5 + $0x30] sm:$0xff]
        %v372 = vld [vmem:[#allocation5 + $0x38] sm:$0xff]
        %v373 = vld [vmem:[#allocation5 + $0x40] sm:$0xff]
        %v374 = vld [vmem:[#allocation5 + $0x48] sm:$0xff]
        %v375 = vld [vmem:[#allocation5 + $0x50] sm:$0xff]
        %v376 = vld [vmem:[#allocation5 + $0x58] sm:$0xff]
        %v377 = vld [vmem:[#allocation5 + $0x60] sm:$0xff]
        %v378 = vld [vmem:[#allocation5 + $0x68] sm:$0xff]
        %v379 = vld [vmem:[#allocation5 + $0x70] sm:$0xff]
        %v380 = vld [vmem:[#allocation5 + $0x78] sm:$0xff]
        %v381 = vld [vmem:[#allocation5 + $0x80] sm:$0xff]
        %v382 = vld [vmem:[#allocation5 + $0x88] sm:$0xff]
        %v383 = vld [vmem:[#allocation5 + $0x90] sm:$0xff]
        %v384 = vld [vmem:[#allocation5 + $0x98] sm:$0xff]
        %v385 = vld [vmem:[#allocation5 + $0xa0] sm:$0xff]
        %v386 = vld [vmem:[#allocation5 + $0xa8] sm:$0xff]
        %v387 = vld [vmem:[#allocation5 + $0xb0] sm:$0xff]
        %v388 = vld [vmem:[#allocation5 + $0xb8] sm:$0xff]
        %v389 = vld [vmem:[#allocation5 + $0xc0] sm:$0xff]
        %v390 = vld [vmem:[#allocation5 + $0xc8] sm:$0xff]
        %v391 = vld [vmem:[#allocation5 + $0xd0] sm:$0xff]
        %v392 = vld [vmem:[#allocation5 + $0xd8] sm:$0xff]
        %v393 = vld [vmem:[#allocation5 + $0xe0] sm:$0xff]
        %v394 = vld [vmem:[#allocation5 + $0xe8] sm:$0xff]
        %v395 = vld [vmem:[#allocation5 + $0xf0] sm:$0xff]
        %v396 = vld [vmem:[#allocation5 + $0xf8] sm:$0xff]
        %v397 = vld [vmem:[#allocation5 + $0x100] sm:$0xff]
        %v398 = vld [vmem:[#allocation5 + $0x108] sm:$0xff]
        %v399 = vld [vmem:[#allocation5 + $0x110] sm:$0xff]
        %v400 = vld [vmem:[#allocation5 + $0x118] sm:$0xff]
        %v401 = vld [vmem:[#allocation5 + $0x120] sm:$0xff]
        %v402 = vld [vmem:[#allocation5 + $0x128] sm:$0xff]
        %v403 = vld [vmem:[#allocation5 + $0x130] sm:$0xff]
        %v404 = vld [vmem:[#allocation5 + $0x138] sm:$0xff]
        %v405 = vld [vmem:[#allocation5 + $0x140] sm:$0xff]
        %v406 = vld [vmem:[#allocation5 + $0x148] sm:$0xff]
        %v407 = vld [vmem:[#allocation5 + $0x150] sm:$0xff]
        %v408 = vld [vmem:[#allocation5 + $0x158] sm:$0xff]
        %v409 = vld [vmem:[#allocation5 + $0x160] sm:$0xff]
        %v410 = vld [vmem:[#allocation5 + $0x168] sm:$0xff]
        %v411 = vld [vmem:[#allocation5 + $0x170] sm:$0xff]
        %v412 = vld [vmem:[#allocation5 + $0x178] sm:$0xff]
        %v413 = vld [vmem:[#allocation5 + $0x180] sm:$0xff]
        %v414 = vld [vmem:[#allocation5 + $0x188] sm:$0xff]
        %v415 = vld [vmem:[#allocation5 + $0x190] sm:$0xff]
        %v416 = vld [vmem:[#allocation5 + $0x198] sm:$0xff]
        %v417 = vld [vmem:[#allocation5 + $0x1a0] sm:$0xff]
        %v418 = vld [vmem:[#allocation5 + $0x1a8] sm:$0xff]
        %v419 = vld [vmem:[#allocation5 + $0x1b0] sm:$0xff]
        %v420 = vld [vmem:[#allocation5 + $0x1b8] sm:$0xff]
        %v421 = vld [vmem:[#allocation5 + $0x1c0] sm:$0xff]
        %v422 = vld [vmem:[#allocation5 + $0x1c8] sm:$0xff]
        %v423 = vld [vmem:[#allocation5 + $0x1d0] sm:$0xff]
        %v424 = vld [vmem:[#allocation5 + $0x1d8] sm:$0xff]
        %v425 = vld [vmem:[#allocation5 + $0x1e0] sm:$0xff]
        %v426 = vld [vmem:[#allocation5 + $0x1e8] sm:$0xff]
        %v427 = vld [vmem:[#allocation5 + $0x1f0] sm:$0xff]
        %v428 = vld [vmem:[#allocation5 + $0x1f8] sm:$0xff]
        %v429 = vld [vmem:[#allocation5 + $0x200] sm:$0xff]
        %v430 = vld [vmem:[#allocation5 + $0x208] sm:$0xff]
        %v431 = vld [vmem:[#allocation5 + $0x210] sm:$0xff]
        %v432 = vld [vmem:[#allocation5 + $0x218] sm:$0xff]
        %v433 = vld [vmem:[#allocation5 + $0x220] sm:$0xff]
        %v434 = vld [vmem:[#allocation5 + $0x228] sm:$0xff]
        %v435 = vld [vmem:[#allocation5 + $0x230] sm:$0xff]
        %v436 = vld [vmem:[#allocation5 + $0x238] sm:$0xff]
        %v437 = vld [vmem:[#allocation5 + $0x240] sm:$0xff]
        %v438 = vld [vmem:[#allocation5 + $0x248] sm:$0xff]
        %v439 = vld [vmem:[#allocation5 + $0x250] sm:$0xff]
        %v440 = vld [vmem:[#allocation5 + $0x258] sm:$0xff]
        %v441 = vld [vmem:[#allocation5 + $0x260] sm:$0xff]
        %v442 = vld [vmem:[#allocation5 + $0x268] sm:$0xff]
        %v443 = vld [vmem:[#allocation5 + $0x270] sm:$0xff]
        %v444 = vld [vmem:[#allocation5 + $0x278] sm:$0xff]
        %v445 = vld [vmem:[#allocation5 + $0x280] sm:$0xff]
        %v446 = vld [vmem:[#allocation5 + $0x288] sm:$0xff]
        %v447 = vld [vmem:[#allocation5 + $0x290] sm:$0xff]
        %v448 = vld [vmem:[#allocation5 + $0x298] sm:$0xff]
        %v449 = vld [vmem:[#allocation5 + $0x2a0] sm:$0xff]
        %v450 = vld [vmem:[#allocation5 + $0x2a8] sm:$0xff]
        %v451 = vld [vmem:[#allocation5 + $0x2b0] sm:$0xff]
        %v452 = vld [vmem:[#allocation5 + $0x2b8] sm:$0xff]
        %v453 = vld [vmem:[#allocation5 + $0x2c0] sm:$0xff]
        %v454 = vld [vmem:[#allocation5 + $0x2c8] sm:$0xff]
        %v455 = vld [vmem:[#allocation5 + $0x2d0] sm:$0xff]
        %v456 = vld [vmem:[#allocation5 + $0x2d8] sm:$0xff]
        %v457 = vld [vmem:[#allocation5 + $0x2e0] sm:$0xff]
        %v458 = vld [vmem:[#allocation5 + $0x2e8] sm:$0xff]
        %v459 = vld [vmem:[#allocation5 + $0x2f0] sm:$0xff]
        %v460 = vld [vmem:[#allocation5 + $0x2f8] sm:$0xff]
        %v461 = vld [vmem:[%s4] sm:$0xf]
        %v463 = vlaneseq
        %v464 = vshrl.u32 %v463, 7
        %v465 = vsub.s32 0, %v464
        %v466 = vrot.slane %v461, %v465
        %v467 = vlaneseq
        %v468 = vshrl.u32 %v467, 7
        %v469 = vsub.s32 1, %v468
        %v470 = vrot.slane %v461, %v469
        %v471 = vlaneseq
        %v472 = vshrl.u32 %v471, 7
        %v473 = vsub.s32 2, %v472
        %v474 = vrot.slane %v461, %v473
        %v475 = vlaneseq
        %v476 = vshrl.u32 %v475, 7
        %v477 = vsub.s32 3, %v476
        %v478 = vrot.slane %v461, %v477
        %v579 = vunpack.c.l.b16 %v365
        %v580 = vunpack.c.h.b16 %v365
        %v581 = vunpack.c.l.b16 %v366
        %v582 = vunpack.c.h.b16 %v366
        %v583 = vunpack.c.l.b16 %v367
        %v584 = vunpack.c.h.b16 %v367
        %v585 = vunpack.c.l.b16 %v368
        %v586 = vunpack.c.h.b16 %v368
        %v587 = vunpack.c.l.b16 %v369
        %v588 = vunpack.c.h.b16 %v369
        %v589 = vunpack.c.l.b16 %v370
        %v590 = vunpack.c.h.b16 %v370
        %v591 = vunpack.c.l.b16 %v371
        %v592 = vunpack.c.h.b16 %v371
        %v593 = vunpack.c.l.b16 %v372
        %v594 = vunpack.c.h.b16 %v372
        %v595 = vunpack.c.l.b16 %v373
        %v596 = vunpack.c.h.b16 %v373
        %v597 = vunpack.c.l.b16 %v374
        %v598 = vunpack.c.h.b16 %v374
        %v599 = vunpack.c.l.b16 %v375
        %v600 = vunpack.c.h.b16 %v375
        %v601 = vunpack.c.l.b16 %v376
        %v602 = vunpack.c.h.b16 %v376
        %v603 = vunpack.c.l.b16 %v377
        %v604 = vunpack.c.h.b16 %v377
        %v605 = vunpack.c.l.b16 %v378
        %v606 = vunpack.c.h.b16 %v378
        %v607 = vunpack.c.l.b16 %v379
        %v608 = vunpack.c.h.b16 %v379
        %v609 = vunpack.c.l.b16 %v380
        %v610 = vunpack.c.h.b16 %v380
        %v611 = vunpack.c.l.b16 %v381
        %v612 = vunpack.c.h.b16 %v381
        %v613 = vunpack.c.l.b16 %v382
        %v614 = vunpack.c.h.b16 %v382
        %v615 = vunpack.c.l.b16 %v383
        %v616 = vunpack.c.h.b16 %v383
        %v617 = vunpack.c.l.b16 %v384
        %v618 = vunpack.c.h.b16 %v384
        %v619 = vunpack.c.l.b16 %v385
        %v620 = vunpack.c.h.b16 %v385
        %v621 = vunpack.c.l.b16 %v386
        %v622 = vunpack.c.h.b16 %v386
        %v623 = vunpack.c.l.b16 %v387
        %v624 = vunpack.c.h.b16 %v387
        %v625 = vunpack.c.l.b16 %v388
        %v626 = vunpack.c.h.b16 %v388
        %v627 = vunpack.c.l.b16 %v389
        %v628 = vunpack.c.h.b16 %v389
        %v629 = vunpack.c.l.b16 %v390
        %v630 = vunpack.c.h.b16 %v390
        %v631 = vunpack.c.l.b16 %v391
        %v632 = vunpack.c.h.b16 %v391
        %v633 = vunpack.c.l.b16 %v392
        %v634 = vunpack.c.h.b16 %v392
        %v635 = vunpack.c.l.b16 %v393
        %v636 = vunpack.c.h.b16 %v393
        %v637 = vunpack.c.l.b16 %v394
        %v638 = vunpack.c.h.b16 %v394
        %v639 = vunpack.c.l.b16 %v395
        %v640 = vunpack.c.h.b16 %v395
        %v641 = vunpack.c.l.b16 %v396
        %v642 = vunpack.c.h.b16 %v396
        %v643 = vunpack.c.l.b16 %v397
        %v644 = vunpack.c.h.b16 %v397
        %v645 = vunpack.c.l.b16 %v398
        %v646 = vunpack.c.h.b16 %v398
        %v647 = vunpack.c.l.b16 %v399
        %v648 = vunpack.c.h.b16 %v399
        %v649 = vunpack.c.l.b16 %v400
        %v650 = vunpack.c.h.b16 %v400
        %v651 = vunpack.c.l.b16 %v401
        %v652 = vunpack.c.h.b16 %v401
        %v653 = vunpack.c.l.b16 %v402
        %v654 = vunpack.c.h.b16 %v402
        %v655 = vunpack.c.l.b16 %v403
        %v656 = vunpack.c.h.b16 %v403
        %v657 = vunpack.c.l.b16 %v404
        %v658 = vunpack.c.h.b16 %v404
        %v659 = vunpack.c.l.b16 %v405
        %v660 = vunpack.c.h.b16 %v405
        %v661 = vunpack.c.l.b16 %v406
        %v662 = vunpack.c.h.b16 %v406
        %v663 = vunpack.c.l.b16 %v407
        %v664 = vunpack.c.h.b16 %v407
        %v665 = vunpack.c.l.b16 %v408
        %v666 = vunpack.c.h.b16 %v408
        %v667 = vunpack.c.l.b16 %v409
        %v668 = vunpack.c.h.b16 %v409
        %v669 = vunpack.c.l.b16 %v410
        %v670 = vunpack.c.h.b16 %v410
        %v671 = vunpack.c.l.b16 %v411
        %v672 = vunpack.c.h.b16 %v411
        %v673 = vunpack.c.l.b16 %v412
        %v674 = vunpack.c.h.b16 %v412
        %v675 = vunpack.c.l.b16 %v413
        %v676 = vunpack.c.h.b16 %v413
        %v677 = vunpack.c.l.b16 %v414
        %v678 = vunpack.c.h.b16 %v414
        %v679 = vunpack.c.l.b16 %v415
        %v680 = vunpack.c.h.b16 %v415
        %v681 = vunpack.c.l.b16 %v416
        %v682 = vunpack.c.h.b16 %v416
        %v683 = vunpack.c.l.b16 %v417
        %v684 = vunpack.c.h.b16 %v417
        %v685 = vunpack.c.l.b16 %v418
        %v686 = vunpack.c.h.b16 %v418
        %v687 = vunpack.c.l.b16 %v419
        %v688 = vunpack.c.h.b16 %v419
        %v689 = vunpack.c.l.b16 %v420
        %v690 = vunpack.c.h.b16 %v420
        %v691 = vunpack.c.l.b16 %v421
        %v692 = vunpack.c.h.b16 %v421
        %v693 = vunpack.c.l.b16 %v422
        %v694 = vunpack.c.h.b16 %v422
        %v695 = vunpack.c.l.b16 %v423
        %v696 = vunpack.c.h.b16 %v423
        %v697 = vunpack.c.l.b16 %v424
        %v698 = vunpack.c.h.b16 %v424
        %v699 = vunpack.c.l.b16 %v425
        %v700 = vunpack.c.h.b16 %v425
        %v701 = vunpack.c.l.b16 %v426
        %v702 = vunpack.c.h.b16 %v426
        %v703 = vunpack.c.l.b16 %v427
        %v704 = vunpack.c.h.b16 %v427
        %v705 = vunpack.c.l.b16 %v428
        %v706 = vunpack.c.h.b16 %v428
        %v707 = vunpack.c.l.b16 %v429
        %v708 = vunpack.c.h.b16 %v429
        %v709 = vunpack.c.l.b16 %v430
        %v710 = vunpack.c.h.b16 %v430
        %v711 = vunpack.c.l.b16 %v431
        %v712 = vunpack.c.h.b16 %v431
        %v713 = vunpack.c.l.b16 %v432
        %v714 = vunpack.c.h.b16 %v432
        %v715 = vunpack.c.l.b16 %v433
        %v716 = vunpack.c.h.b16 %v433
        %v717 = vunpack.c.l.b16 %v434
        %v718 = vunpack.c.h.b16 %v434
        %v719 = vunpack.c.l.b16 %v435
        %v720 = vunpack.c.h.b16 %v435
        %v721 = vunpack.c.l.b16 %v436
        %v722 = vunpack.c.h.b16 %v436
        %v723 = vunpack.c.l.b16 %v437
        %v724 = vunpack.c.h.b16 %v437
        %v725 = vunpack.c.l.b16 %v438
        %v726 = vunpack.c.h.b16 %v438
        %v727 = vunpack.c.l.b16 %v439
        %v728 = vunpack.c.h.b16 %v439
        %v729 = vunpack.c.l.b16 %v440
        %v730 = vunpack.c.h.b16 %v440
        %v731 = vunpack.c.l.b16 %v441
        %v732 = vunpack.c.h.b16 %v441
        %v733 = vunpack.c.l.b16 %v442
        %v734 = vunpack.c.h.b16 %v442
        %v735 = vunpack.c.l.b16 %v443
        %v736 = vunpack.c.h.b16 %v443
        %v737 = vunpack.c.l.b16 %v444
        %v738 = vunpack.c.h.b16 %v444
        %v739 = vunpack.c.l.b16 %v445
        %v740 = vunpack.c.h.b16 %v445
        %v741 = vunpack.c.l.b16 %v446
        %v742 = vunpack.c.h.b16 %v446
        %v743 = vunpack.c.l.b16 %v447
        %v744 = vunpack.c.h.b16 %v447
        %v745 = vunpack.c.l.b16 %v448
        %v746 = vunpack.c.h.b16 %v448
        %v747 = vunpack.c.l.b16 %v449
        %v748 = vunpack.c.h.b16 %v449
        %v749 = vunpack.c.l.b16 %v450
        %v750 = vunpack.c.h.b16 %v450
        %v751 = vunpack.c.l.b16 %v451
        %v752 = vunpack.c.h.b16 %v451
        %v753 = vunpack.c.l.b16 %v452
        %v754 = vunpack.c.h.b16 %v452
        %v755 = vunpack.c.l.b16 %v453
        %v756 = vunpack.c.h.b16 %v453
        %v757 = vunpack.c.l.b16 %v454
        %v758 = vunpack.c.h.b16 %v454
        %v759 = vunpack.c.l.b16 %v455
        %v760 = vunpack.c.h.b16 %v455
        %v761 = vunpack.c.l.b16 %v456
        %v762 = vunpack.c.h.b16 %v456
        %v763 = vunpack.c.l.b16 %v457
        %v764 = vunpack.c.h.b16 %v457
        %v765 = vunpack.c.l.b16 %v458
        %v766 = vunpack.c.h.b16 %v458
        %v767 = vunpack.c.l.b16 %v459
        %v768 = vunpack.c.h.b16 %v459
        %v769 = vunpack.c.l.b16 %v460
        %v770 = vunpack.c.h.b16 %v460
        %v771 = vpack.c.b16 %v583, %v579
        %v772 = vpack.c.b16 %v584, %v580
        %v773 = vpack.c.b16 %v585, %v581
        %v774 = vpack.c.b16 %v586, %v582
        %v775 = vpack.c.b16 %v591, %v587
        %v776 = vpack.c.b16 %v592, %v588
        %v777 = vpack.c.b16 %v593, %v589
        %v778 = vpack.c.b16 %v594, %v590
        %v779 = vpack.c.b16 %v599, %v595
        %v780 = vpack.c.b16 %v600, %v596
        %v781 = vpack.c.b16 %v601, %v597
        %v782 = vpack.c.b16 %v602, %v598
        %v783 = vpack.c.b16 %v607, %v603
        %v784 = vpack.c.b16 %v608, %v604
        %v785 = vpack.c.b16 %v609, %v605
        %v786 = vpack.c.b16 %v610, %v606
        %v787 = vpack.c.b16 %v615, %v611
        %v788 = vpack.c.b16 %v616, %v612
        %v789 = vpack.c.b16 %v617, %v613
        %v790 = vpack.c.b16 %v618, %v614
        %v791 = vpack.c.b16 %v623, %v619
        %v792 = vpack.c.b16 %v624, %v620
        %v793 = vpack.c.b16 %v625, %v621
        %v794 = vpack.c.b16 %v626, %v622
        %v795 = vpack.c.b16 %v631, %v627
        %v796 = vpack.c.b16 %v632, %v628
        %v797 = vpack.c.b16 %v633, %v629
        %v798 = vpack.c.b16 %v634, %v630
        %v799 = vpack.c.b16 %v639, %v635
        %v800 = vpack.c.b16 %v640, %v636
        %v801 = vpack.c.b16 %v641, %v637
        %v802 = vpack.c.b16 %v642, %v638
        %v803 = vpack.c.b16 %v647, %v643
        %v804 = vpack.c.b16 %v648, %v644
        %v805 = vpack.c.b16 %v649, %v645
        %v806 = vpack.c.b16 %v650, %v646
        %v807 = vpack.c.b16 %v655, %v651
        %v808 = vpack.c.b16 %v656, %v652
        %v809 = vpack.c.b16 %v657, %v653
        %v810 = vpack.c.b16 %v658, %v654
        %v811 = vpack.c.b16 %v663, %v659
        %v812 = vpack.c.b16 %v664, %v660
        %v813 = vpack.c.b16 %v665, %v661
        %v814 = vpack.c.b16 %v666, %v662
        %v815 = vpack.c.b16 %v671, %v667
        %v816 = vpack.c.b16 %v672, %v668
        %v817 = vpack.c.b16 %v673, %v669
        %v818 = vpack.c.b16 %v674, %v670
        %v819 = vpack.c.b16 %v679, %v675
        %v820 = vpack.c.b16 %v680, %v676
        %v821 = vpack.c.b16 %v681, %v677
        %v822 = vpack.c.b16 %v682, %v678
        %v823 = vpack.c.b16 %v687, %v683
        %v824 = vpack.c.b16 %v688, %v684
        %v825 = vpack.c.b16 %v689, %v685
        %v826 = vpack.c.b16 %v690, %v686
        %v827 = vpack.c.b16 %v695, %v691
        %v828 = vpack.c.b16 %v696, %v692
        %v829 = vpack.c.b16 %v697, %v693
        %v830 = vpack.c.b16 %v698, %v694
        %v831 = vpack.c.b16 %v703, %v699
        %v832 = vpack.c.b16 %v704, %v700
        %v833 = vpack.c.b16 %v705, %v701
        %v834 = vpack.c.b16 %v706, %v702
        %v835 = vpack.c.b16 %v711, %v707
        %v836 = vpack.c.b16 %v712, %v708
        %v837 = vpack.c.b16 %v713, %v709
        %v838 = vpack.c.b16 %v714, %v710
        %v839 = vpack.c.b16 %v719, %v715
        %v840 = vpack.c.b16 %v720, %v716
        %v841 = vpack.c.b16 %v721, %v717
        %v842 = vpack.c.b16 %v722, %v718
        %v843 = vpack.c.b16 %v727, %v723
        %v844 = vpack.c.b16 %v728, %v724
        %v845 = vpack.c.b16 %v729, %v725
        %v846 = vpack.c.b16 %v730, %v726
        %v847 = vpack.c.b16 %v735, %v731
        %v848 = vpack.c.b16 %v736, %v732
        %v849 = vpack.c.b16 %v737, %v733
        %v850 = vpack.c.b16 %v738, %v734
        %v851 = vpack.c.b16 %v743, %v739
        %v852 = vpack.c.b16 %v744, %v740
        %v853 = vpack.c.b16 %v745, %v741
        %v854 = vpack.c.b16 %v746, %v742
        %v855 = vpack.c.b16 %v751, %v747
        %v856 = vpack.c.b16 %v752, %v748
        %v857 = vpack.c.b16 %v753, %v749
        %v858 = vpack.c.b16 %v754, %v750
        %v859 = vpack.c.b16 %v759, %v755
        %v860 = vpack.c.b16 %v760, %v756
        %v861 = vpack.c.b16 %v761, %v757
        %v862 = vpack.c.b16 %v762, %v758
        %v863 = vpack.c.b16 %v767, %v763
        %v864 = vpack.c.b16 %v768, %v764
        %v865 = vpack.c.b16 %v769, %v765
        %v866 = vpack.c.b16 %v770, %v766
        %963 = vmatprep.subr.bf16.mxu0 %v772
        %964 = vmatpush1.bf16.msra.mxu0 %v771
        %965 = vmatprep.subr.bf16.mxu0 %v776
        %966 = vmatpush1.bf16.msra.mxu0 %v775
        %967 = vmatprep.subr.bf16.mxu0 %v780
        %968 = vmatpush1.bf16.msra.mxu0 %v779
        %969 = vmatprep.subr.bf16.mxu0 %v784
        %970 = vmatpush1.bf16.msra.mxu0 %v783
        %971 = vmatprep.subr.bf16.mxu0 %v788
        %972 = vmatpush1.bf16.msra.mxu0 %v787
        %973 = vmatprep.subr.bf16.mxu0 %v792
        %974 = vmatpush1.bf16.msra.mxu0 %v791
        %975 = vmatprep.subr.bf16.mxu0 %v796
        %976 = vmatpush1.bf16.msra.mxu0 %v795
        %977 = vmatprep.subr.bf16.mxu0 %v800
        %978 = vmatpush1.bf16.msra.mxu0 %v799
        %979 = vmatprep.subr.bf16.mxu0 %v804
        %980 = vmatpush1.bf16.msra.mxu0 %v803
        %981 = vmatprep.subr.bf16.mxu0 %v808
        %982 = vmatpush1.bf16.msra.mxu0 %v807
        %983 = vmatprep.subr.bf16.mxu0 %v812
        %984 = vmatpush1.bf16.msra.mxu0 %v811
        %985 = vmatprep.subr.bf16.mxu0 %v816
        %986 = vmatpush1.bf16.msra.mxu0 %v815
        %987 = vmatprep.subr.bf16.mxu0 %v820
        %988 = vmatpush1.bf16.msra.mxu0 %v819
        %989 = vmatprep.subr.bf16.mxu0 %v824
        %990 = vmatpush1.bf16.msra.mxu0 %v823
        %991 = vmatprep.subr.bf16.mxu0 %v828
        %992 = vmatpush1.bf16.msra.mxu0 %v827
        %993 = vmatprep.subr.bf16.mxu0 %v832
        %994 = vmatpush1.bf16.msra.mxu0 %v831
        %995 = vmatprep.mubr.bf16.mxu0 %v363
        %996 = vmatmul.mubr.bf16.gmra.mrb[0].mxu0 %v362
        %v997 = vpop.f32.mrb[0].mxu0
        %v998 = vadd.f32 %v466, %v997
        %v999 = vpop.f32.mrb[0].mxu0
        %v1000 = vadd.f32 %v470, %v999
        %v1001 = vpop.f32.mrb[0].mxu0
        %v1002 = vadd.f32 %v466, %v1001
        %v1003 = vpop.f32.mrb[0].mxu0
        %v1004 = vadd.f32 %v470, %v1003
        %1005 = vdwg.mxu0
        %1006 = vmatprep.subr.bf16.mxu0 %v836
        %1007 = vmatpush1.bf16.msra.mxu0 %v835
        %1008 = vmatprep.subr.bf16.mxu0 %v840
        %1009 = vmatpush1.bf16.msra.mxu0 %v839
        %1010 = vmatprep.subr.bf16.mxu0 %v844
        %1011 = vmatpush1.bf16.msra.mxu0 %v843
        %1012 = vmatprep.subr.bf16.mxu0 %v848
        %1013 = vmatpush1.bf16.msra.mxu0 %v847
        %1014 = vmatprep.subr.bf16.mxu0 %v852
        %1015 = vmatpush1.bf16.msra.mxu0 %v851
        %1016 = vmatprep.subr.bf16.mxu0 %v856
        %1017 = vmatpush1.bf16.msra.mxu0 %v855
        %1018 = vmatprep.subr.bf16.mxu0 %v860
        %1019 = vmatpush1.bf16.msra.mxu0 %v859
        %1020 = vmatprep.subr.bf16.mxu0 %v864
        %1021 = vmatpush1.bf16.msra.mxu0 %v863
        %1022 = vmatprep.subr.bf16.mxu0 0
        %1023 = vmatpush1.bf16.msra.mxu0 0
        %1024 = vmatprep.subr.bf16.mxu0 0
        %1025 = vmatpush1.bf16.msra.mxu0 0
        %1026 = vmatprep.subr.bf16.mxu0 0
        %1027 = vmatpush1.bf16.msra.mxu0 0
        %1028 = vmatprep.subr.bf16.mxu0 0
        %1029 = vmatpush1.bf16.msra.mxu0 0
        %1030 = vmatprep.subr.bf16.mxu0 0
        %1031 = vmatpush1.bf16.msra.mxu0 0
        %1032 = vmatprep.subr.bf16.mxu0 0
        %1033 = vmatpush1.bf16.msra.mxu0 0
        %1034 = vmatprep.subr.bf16.mxu0 0
        %1035 = vmatpush1.bf16.msra.mxu0 0
        %1036 = vmatprep.subr.bf16.mxu0 0
        %1037 = vmatpush1.bf16.msra.mxu0 0
        %1038 = vmatprep.mubr.bf16.mxu0 0
        %1039 = vmatmul.mubr.bf16.gmra.mrb[0].mxu0 %v364
        %v1040 = vpop.f32.mrb[0].mxu0
        %v1041 = vadd.f32 %v998, %v1040
        %v1042 = vpop.f32.mrb[0].mxu0
        %v1043 = vadd.f32 %v1000, %v1042
        %v1044 = vpop.f32.mrb[0].mxu0
        %v1045 = vadd.f32 %v1002, %v1044
        %v1046 = vpop.f32.mrb[0].mxu0
        %v1047 = vadd.f32 %v1004, %v1046
        %1048 = vdwg.mxu0
        %1049 = vmatprep.subr.bf16.mxu0 %v774
        %1050 = vmatpush1.bf16.msra.mxu0 %v773
        %1051 = vmatprep.subr.bf16.mxu0 %v778
        %1052 = vmatpush1.bf16.msra.mxu0 %v777
        %1053 = vmatprep.subr.bf16.mxu0 %v782
        %1054 = vmatpush1.bf16.msra.mxu0 %v781
        %1055 = vmatprep.subr.bf16.mxu0 %v786
        %1056 = vmatpush1.bf16.msra.mxu0 %v785
        %1057 = vmatprep.subr.bf16.mxu0 %v790
        %1058 = vmatpush1.bf16.msra.mxu0 %v789
        %1059 = vmatprep.subr.bf16.mxu0 %v794
        %1060 = vmatpush1.bf16.msra.mxu0 %v793
        %1061 = vmatprep.subr.bf16.mxu0 %v798
        %1062 = vmatpush1.bf16.msra.mxu0 %v797
        %1063 = vmatprep.subr.bf16.mxu0 %v802
        %1064 = vmatpush1.bf16.msra.mxu0 %v801
        %1065 = vmatprep.subr.bf16.mxu0 %v806
        %1066 = vmatpush1.bf16.msra.mxu0 %v805
        %1067 = vmatprep.subr.bf16.mxu0 %v810
        %1068 = vmatpush1.bf16.msra.mxu0 %v809
        %1069 = vmatprep.subr.bf16.mxu0 %v814
        %1070 = vmatpush1.bf16.msra.mxu0 %v813
        %1071 = vmatprep.subr.bf16.mxu0 %v818
        %1072 = vmatpush1.bf16.msra.mxu0 %v817
        %1073 = vmatprep.subr.bf16.mxu0 %v822
        %1074 = vmatpush1.bf16.msra.mxu0 %v821
        %1075 = vmatprep.subr.bf16.mxu0 %v826
        %1076 = vmatpush1.bf16.msra.mxu0 %v825
        %1077 = vmatprep.subr.bf16.mxu0 %v830
        %1078 = vmatpush1.bf16.msra.mxu0 %v829
        %1079 = vmatprep.subr.bf16.mxu0 %v834
        %1080 = vmatpush1.bf16.msra.mxu0 %v833
        %1081 = vmatprep.mubr.bf16.mxu0 %v363
        %1082 = vmatmul.mubr.bf16.gmra.mrb[0].mxu0 %v362
        %v1083 = vpop.f32.mrb[0].mxu0
        %v1084 = vadd.f32 %v474, %v1083
        %v1085 = vpop.f32.mrb[0].mxu0
        %v1086 = vadd.f32 %v478, %v1085
        %v1087 = vpop.f32.mrb[0].mxu0
        %v1088 = vadd.f32 %v474, %v1087
        %v1089 = vpop.f32.mrb[0].mxu0
        %v1090 = vadd.f32 %v478, %v1089
        %1091 = vdwg.mxu0
        %1092 = vmatprep.subr.bf16.mxu0 %v838
        %1093 = vmatpush1.bf16.msra.mxu0 %v837
        %1094 = vmatprep.subr.bf16.mxu0 %v842
        %1095 = vmatpush1.bf16.msra.mxu0 %v841
        %1096 = vmatprep.subr.bf16.mxu0 %v846
        %1097 = vmatpush1.bf16.msra.mxu0 %v845
        %1098 = vmatprep.subr.bf16.mxu0 %v850
        %1099 = vmatpush1.bf16.msra.mxu0 %v849
        %1100 = vmatprep.subr.bf16.mxu0 %v854
        %1101 = vmatpush1.bf16.msra.mxu0 %v853
        %1102 = vmatprep.subr.bf16.mxu0 %v858
        %1103 = vmatpush1.bf16.msra.mxu0 %v857
        %1104 = vmatprep.subr.bf16.mxu0 %v862
        %1105 = vmatpush1.bf16.msra.mxu0 %v861
        %1106 = vmatprep.subr.bf16.mxu0 %v866
        %1107 = vmatpush1.bf16.msra.mxu0 %v865
        %1108 = vmatprep.subr.bf16.mxu0 0
        %1109 = vmatpush1.bf16.msra.mxu0 0
        %1110 = vmatprep.subr.bf16.mxu0 0
        %1111 = vmatpush1.bf16.msra.mxu0 0
        %1112 = vmatprep.subr.bf16.mxu0 0
        %1113 = vmatpush1.bf16.msra.mxu0 0
        %1114 = vmatprep.subr.bf16.mxu0 0
        %1115 = vmatpush1.bf16.msra.mxu0 0
        %1116 = vmatprep.subr.bf16.mxu0 0
        %1117 = vmatpush1.bf16.msra.mxu0 0
        %1118 = vmatprep.subr.bf16.mxu0 0
        %1119 = vmatpush1.bf16.msra.mxu0 0
        %1120 = vmatprep.subr.bf16.mxu0 0
        %1121 = vmatpush1.bf16.msra.mxu0 0
        %1122 = vmatprep.subr.bf16.mxu0 0
        %1123 = vmatpush1.bf16.msra.mxu0 0
        %1124 = vmatprep.mubr.bf16.mxu0 0
        %1125 = vmatmul.mubr.bf16.gmra.mrb[0].mxu0 %v364
        %v1126 = vpop.f32.mrb[0].mxu0
        %v1127 = vadd.f32 %v1084, %v1126
        %v1128 = vpop.f32.mrb[0].mxu0
        %v1129 = vadd.f32 %v1086, %v1128
        %v1130 = vpop.f32.mrb[0].mxu0
        %v1131 = vadd.f32 %v1088, %v1130
        %v1132 = vpop.f32.mrb[0].mxu0
        %v1133 = vadd.f32 %v1090, %v1132
        %1134 = vdwg.mxu0
        %v1135 = vmax.f32 %v1041, 0.0
        %v1136 = vmax.f32 %v1043, 0.0
        %v1137 = vmax.f32 %v1127, 0.0
        %v1138 = vmax.f32 %v1129, 0.0
        %v1139 = vmax.f32 %v1045, 0.0
        %v1140 = vmax.f32 %v1047, 0.0
        %v1141 = vmax.f32 %v1131, 0.0
        %v1142 = vmax.f32 %v1133, 0.0
        %v1143 = vadd.f32 %v1135, %v1139
        %v1144 = vrot.slane %v1143, 4
        %v1145 = vadd.f32 %v1143, %v1144
        %v1146 = vrot.slane %v1145, 2
        %v1147 = vadd.f32 %v1145, %v1146
        %v1148 = vrot.slane %v1147, 1
        %v1149 = vadd.f32 %v1147, %v1148
        %v1150 = vadd.f32 %v1136, %v1140
        %v1151 = vrot.slane %v1150, 4
        %v1152 = vadd.f32 %v1150, %v1151
        %v1153 = vrot.slane %v1152, 2
        %v1154 = vadd.f32 %v1152, %v1153
        %v1155 = vrot.slane %v1154, 1
        %v1156 = vadd.f32 %v1154, %v1155
        %v1157 = vadd.f32 %v1137, %v1141
        %v1158 = vrot.slane %v1157, 4
        %v1159 = vadd.f32 %v1157, %v1158
        %v1160 = vrot.slane %v1159, 2
        %v1161 = vadd.f32 %v1159, %v1160
        %v1162 = vrot.slane %v1161, 1
        %v1163 = vadd.f32 %v1161, %v1162
        %v1164 = vadd.f32 %v1138, %v1142
        %v1165 = vrot.slane %v1164, 4
        %v1166 = vadd.f32 %v1164, %v1165
        %v1167 = vrot.slane %v1166, 2
        %v1168 = vadd.f32 %v1166, %v1167
        %v1169 = vrot.slane %v1168, 1
        %v1170 = vadd.f32 %v1168, %v1169
        %v1171 = vmul.f32 %v1149, 0.00390625
        %v1172 = vmul.f32 %v1156, 0.00390625
        %v1173 = vmul.f32 %v1163, 0.00390625
        %v1174 = vmul.f32 %v1170, 0.00390625
        %v1175 = vld [vmem:[#allocation7] sm:$0xff]
        %v1176 = vld [vmem:[#allocation7 + $0x8] sm:$0xff]
        %v1177 = vld [vmem:[#allocation7 + $0x10] sm:$0xff]
        %v1178 = vld [vmem:[#allocation7 + $0x18] sm:$0xff]
        %v1179 = vld [vmem:[#allocation7 + $0x20] sm:$0xff]
        %v1180 = vld [vmem:[#allocation7 + $0x28] sm:$0xff]
        %v1181 = vld [vmem:[#allocation7 + $0x30] sm:$0xff]
        %v1182 = vld [vmem:[#allocation7 + $0x38] sm:$0xff]
        %v1183 = vld [vmem:[#allocation7 + $0x40] sm:$0xff]
        %v1184 = vld [vmem:[#allocation7 + $0x48] sm:$0xff]
        %v1185 = vld [vmem:[#allocation7 + $0x50] sm:$0xff]
        %v1186 = vld [vmem:[#allocation7 + $0x58] sm:$0xff]
        %v1187 = vld [vmem:[#allocation7 + $0x60] sm:$0xff]
        %v1188 = vld [vmem:[#allocation7 + $0x68] sm:$0xff]
        %v1189 = vld [vmem:[#allocation7 + $0x70] sm:$0xff]
        %v1190 = vld [vmem:[#allocation7 + $0x78] sm:$0xff]
        %v1191 = vld [vmem:[#allocation7 + $0x80] sm:$0xff]
        %v1192 = vld [vmem:[#allocation7 + $0x88] sm:$0xff]
        %v1193 = vld [vmem:[#allocation7 + $0x90] sm:$0xff]
        %v1194 = vld [vmem:[#allocation7 + $0x98] sm:$0xff]
        %v1195 = vld [vmem:[#allocation7 + $0xa0] sm:$0xff]
        %v1196 = vld [vmem:[#allocation7 + $0xa8] sm:$0xff]
        %v1197 = vld [vmem:[#allocation7 + $0xb0] sm:$0xff]
        %v1198 = vld [vmem:[#allocation7 + $0xb8] sm:$0xff]
        %v1199 = vld [vmem:[#allocation7 + $0xc0] sm:$0xff]
        %v1200 = vld [vmem:[#allocation7 + $0xc8] sm:$0xff]
        %v1201 = vld [vmem:[#allocation7 + $0xd0] sm:$0xff]
        %v1202 = vld [vmem:[#allocation7 + $0xd8] sm:$0xff]
        %v1203 = vld [vmem:[#allocation7 + $0xe0] sm:$0xff]
        %v1204 = vld [vmem:[#allocation7 + $0xe8] sm:$0xff]
        %v1205 = vld [vmem:[#allocation7 + $0xf0] sm:$0xff]
        %v1206 = vld [vmem:[#allocation7 + $0xf8] sm:$0xff]
        %v1207 = vld [vmem:[#allocation7 + $0x100] sm:$0xff]
        %v1208 = vld [vmem:[#allocation7 + $0x108] sm:$0xff]
        %v1209 = vld [vmem:[#allocation7 + $0x110] sm:$0xff]
        %v1210 = vld [vmem:[#allocation7 + $0x118] sm:$0xff]
        %v1211 = vld [vmem:[#allocation7 + $0x120] sm:$0xff]
        %v1212 = vld [vmem:[#allocation7 + $0x128] sm:$0xff]
        %v1213 = vld [vmem:[#allocation7 + $0x130] sm:$0xff]
        %v1214 = vld [vmem:[#allocation7 + $0x138] sm:$0xff]
        %v1215 = vld [vmem:[#allocation7 + $0x140] sm:$0xff]
        %v1216 = vld [vmem:[#allocation7 + $0x148] sm:$0xff]
        %v1217 = vld [vmem:[#allocation7 + $0x150] sm:$0xff]
        %v1218 = vld [vmem:[#allocation7 + $0x158] sm:$0xff]
        %v1219 = vld [vmem:[#allocation7 + $0x160] sm:$0xff]
        %v1220 = vld [vmem:[#allocation7 + $0x168] sm:$0xff]
        %v1221 = vld [vmem:[#allocation7 + $0x170] sm:$0xff]
        %v1222 = vld [vmem:[#allocation7 + $0x178] sm:$0xff]
        %v1223 = vld [vmem:[#allocation7 + $0x180] sm:$0xff]
        %v1224 = vld [vmem:[#allocation7 + $0x188] sm:$0xff]
        %v1225 = vld [vmem:[#allocation7 + $0x190] sm:$0xff]
        %v1226 = vld [vmem:[#allocation7 + $0x198] sm:$0xff]
        %v1227 = vld [vmem:[#allocation7 + $0x1a0] sm:$0xff]
        %v1228 = vld [vmem:[#allocation7 + $0x1a8] sm:$0xff]
        %v1229 = vld [vmem:[#allocation7 + $0x1b0] sm:$0xff]
        %v1230 = vld [vmem:[#allocation7 + $0x1b8] sm:$0xff]
        %v1231 = vld [vmem:[#allocation7 + $0x1c0] sm:$0xff]
        %v1232 = vld [vmem:[#allocation7 + $0x1c8] sm:$0xff]
        %v1233 = vld [vmem:[#allocation7 + $0x1d0] sm:$0xff]
        %v1234 = vld [vmem:[#allocation7 + $0x1d8] sm:$0xff]
        %v1235 = vld [vmem:[#allocation7 + $0x1e0] sm:$0xff]
        %v1236 = vld [vmem:[#allocation7 + $0x1e8] sm:$0xff]
        %v1237 = vld [vmem:[#allocation7 + $0x1f0] sm:$0xff]
        %v1238 = vld [vmem:[#allocation7 + $0x1f8] sm:$0xff]
        %v1239 = vld [vmem:[%s6] sm:$0x1]
        %1240 = vmatprep.subr.mxu0 0.0
        %1241 = vmatpush1.msra.mxu0 %v1175
        %1242 = vmatprep.subr.mxu0 0.0
        %1243 = vmatpush1.msra.mxu0 %v1176
        %1244 = vmatprep.subr.mxu0 0.0
        %1245 = vmatpush1.msra.mxu0 %v1177
        %1246 = vmatprep.subr.mxu0 0.0
        %1247 = vmatpush1.msra.mxu0 %v1178
        %1248 = vmatprep.subr.mxu0 0.0
        %1249 = vmatpush1.msra.mxu0 %v1179
        %1250 = vmatprep.subr.mxu0 0.0
        %1251 = vmatpush1.msra.mxu0 %v1180
        %1252 = vmatprep.subr.mxu0 0.0
        %1253 = vmatpush1.msra.mxu0 %v1181
        %1254 = vmatprep.subr.mxu0 0.0
        %1255 = vmatpush1.msra.mxu0 %v1182
        %1256 = vmatprep.subr.mxu0 0.0
        %1257 = vmatpush1.msra.mxu0 %v1183
        %1258 = vmatprep.subr.mxu0 0.0
        %1259 = vmatpush1.msra.mxu0 %v1184
        %1260 = vmatprep.subr.mxu0 0.0
        %1261 = vmatpush1.msra.mxu0 %v1185
        %1262 = vmatprep.subr.mxu0 0.0
        %1263 = vmatpush1.msra.mxu0 %v1186
        %1264 = vmatprep.subr.mxu0 0.0
        %1265 = vmatpush1.msra.mxu0 %v1187
        %1266 = vmatprep.subr.mxu0 0.0
        %1267 = vmatpush1.msra.mxu0 %v1188
        %1268 = vmatprep.subr.mxu0 0.0
        %1269 = vmatpush1.msra.mxu0 %v1189
        %1270 = vmatprep.subr.mxu0 0.0
        %1271 = vmatpush1.msra.mxu0 %v1190
        %1272 = vmatprep.subr.mxu0 0.0
        %1273 = vmatpush1.msra.mxu0 %v1191
        %1274 = vmatprep.subr.mxu0 0.0
        %1275 = vmatpush1.msra.mxu0 %v1192
        %1276 = vmatprep.subr.mxu0 0.0
        %1277 = vmatpush1.msra.mxu0 %v1193
        %1278 = vmatprep.subr.mxu0 0.0
        %1279 = vmatpush1.msra.mxu0 %v1194
        %1280 = vmatprep.subr.mxu0 0.0
        %1281 = vmatpush1.msra.mxu0 %v1195
        %1282 = vmatprep.subr.mxu0 0.0
        %1283 = vmatpush1.msra.mxu0 %v1196
        %1284 = vmatprep.subr.mxu0 0.0
        %1285 = vmatpush1.msra.mxu0 %v1197
        %1286 = vmatprep.subr.mxu0 0.0
        %1287 = vmatpush1.msra.mxu0 %v1198
        %1288 = vmatprep.subr.mxu0 0.0
        %1289 = vmatpush1.msra.mxu0 %v1199
        %1290 = vmatprep.subr.mxu0 0.0
        %1291 = vmatpush1.msra.mxu0 %v1200
        %1292 = vmatprep.subr.mxu0 0.0
        %1293 = vmatpush1.msra.mxu0 %v1201
        %1294 = vmatprep.subr.mxu0 0.0
        %1295 = vmatpush1.msra.mxu0 %v1202
        %1296 = vmatprep.subr.mxu0 0.0
        %1297 = vmatpush1.msra.mxu0 %v1203
        %1298 = vmatprep.subr.mxu0 0.0
        %1299 = vmatpush1.msra.mxu0 %v1204
        %1300 = vmatprep.subr.mxu0 0.0
        %1301 = vmatpush1.msra.mxu0 %v1205
        %1302 = vmatprep.subr.mxu0 0.0
        %1303 = vmatpush1.msra.mxu0 %v1206
        %1304 = vmatprep.mubr.f32.mxu0 %v1172
        %1305 = vmatmul.mubr.f32.gmra.mrb[0].mxu0 %v1171
        %v1306 = vpop.f32.mrb[0].mxu0
        %v1307 = vadd.f32 %v1239, %v1306
        %v1308 = vpop.f32.mrb[0].mxu0
        %1309 = vdwg.mxu0
        %1310 = vmatprep.subr.mxu0 0.0
        %1311 = vmatpush1.msra.mxu0 %v1207
        %1312 = vmatprep.subr.mxu0 0.0
        %1313 = vmatpush1.msra.mxu0 %v1208
        %1314 = vmatprep.subr.mxu0 0.0
        %1315 = vmatpush1.msra.mxu0 %v1209
        %1316 = vmatprep.subr.mxu0 0.0
        %1317 = vmatpush1.msra.mxu0 %v1210
        %1318 = vmatprep.subr.mxu0 0.0
        %1319 = vmatpush1.msra.mxu0 %v1211
        %1320 = vmatprep.subr.mxu0 0.0
        %1321 = vmatpush1.msra.mxu0 %v1212
        %1322 = vmatprep.subr.mxu0 0.0
        %1323 = vmatpush1.msra.mxu0 %v1213
        %1324 = vmatprep.subr.mxu0 0.0
        %1325 = vmatpush1.msra.mxu0 %v1214
        %1326 = vmatprep.subr.mxu0 0.0
        %1327 = vmatpush1.msra.mxu0 %v1215
        %1328 = vmatprep.subr.mxu0 0.0
        %1329 = vmatpush1.msra.mxu0 %v1216
        %1330 = vmatprep.subr.mxu0 0.0
        %1331 = vmatpush1.msra.mxu0 %v1217
        %1332 = vmatprep.subr.mxu0 0.0
        %1333 = vmatpush1.msra.mxu0 %v1218
        %1334 = vmatprep.subr.mxu0 0.0
        %1335 = vmatpush1.msra.mxu0 %v1219
        %1336 = vmatprep.subr.mxu0 0.0
        %1337 = vmatpush1.msra.mxu0 %v1220
        %1338 = vmatprep.subr.mxu0 0.0
        %1339 = vmatpush1.msra.mxu0 %v1221
        %1340 = vmatprep.subr.mxu0 0.0
        %1341 = vmatpush1.msra.mxu0 %v1222
        %1342 = vmatprep.subr.mxu0 0.0
        %1343 = vmatpush1.msra.mxu0 %v1223
        %1344 = vmatprep.subr.mxu0 0.0
        %1345 = vmatpush1.msra.mxu0 %v1224
        %1346 = vmatprep.subr.mxu0 0.0
        %1347 = vmatpush1.msra.mxu0 %v1225
        %1348 = vmatprep.subr.mxu0 0.0
        %1349 = vmatpush1.msra.mxu0 %v1226
        %1350 = vmatprep.subr.mxu0 0.0
        %1351 = vmatpush1.msra.mxu0 %v1227
        %1352 = vmatprep.subr.mxu0 0.0
        %1353 = vmatpush1.msra.mxu0 %v1228
        %1354 = vmatprep.subr.mxu0 0.0
        %1355 = vmatpush1.msra.mxu0 %v1229
        %1356 = vmatprep.subr.mxu0 0.0
        %1357 = vmatpush1.msra.mxu0 %v1230
        %1358 = vmatprep.subr.mxu0 0.0
        %1359 = vmatpush1.msra.mxu0 %v1231
        %1360 = vmatprep.subr.mxu0 0.0
        %1361 = vmatpush1.msra.mxu0 %v1232
        %1362 = vmatprep.subr.mxu0 0.0
        %1363 = vmatpush1.msra.mxu0 %v1233
        %1364 = vmatprep.subr.mxu0 0.0
        %1365 = vmatpush1.msra.mxu0 %v1234
        %1366 = vmatprep.subr.mxu0 0.0
        %1367 = vmatpush1.msra.mxu0 %v1235
        %1368 = vmatprep.subr.mxu0 0.0
        %1369 = vmatpush1.msra.mxu0 %v1236
        %1370 = vmatprep.subr.mxu0 0.0
        %1371 = vmatpush1.msra.mxu0 %v1237
        %1372 = vmatprep.subr.mxu0 0.0
        %1373 = vmatpush1.msra.mxu0 %v1238
        %1374 = vmatprep.mubr.f32.mxu0 %v1174
        %1375 = vmatmul.mubr.f32.gmra.mrb[0].mxu0 %v1173
        %v1376 = vpop.f32.mrb[0].mxu0
        %v1377 = vadd.f32 %v1307, %v1376
        %v1378 = vpop.f32.mrb[0].mxu0
        %1379 = vdwg.mxu0
        %1380 = vst [vmem:[%s324] sm:$0x1] %v1377
        %s1381 = sand.u32 %s185, 1
        %s1382 = scalar_lea.sflag [#allocation4], %s1381
        %s1383 = sand.u32 %s185, 1
        %s1384 = scalar_lea.vmem [#allocation8], %s1383
        // Predicated region
        $region61: #{tpu_custom_call.1} parent=47 // pred_check
          %p1385 = pneg %p195
        $region62: #{tpu_custom_call.1} parent=47 // pred_check_branch
          %1387 = sbr.rel (%p1385) target = $region64
        $region63: #{tpu_custom_call.1} parent=47 // pred_region
          %s1389 = ssub.s32 16, 16
          %1390 = vsyncadd %s1382, %s1389
          %s1391 = smul.addr %s25, 16
          %s1392 = scalar_lea.hbm %s7, %s1391
          %s1394 = sshll.u32 %s1384, 4
          %s1395 = int_to_ptr.vmem [resolvable:$true] %s1394
          %1397 = dma.vmem_to_hbm [thread:$0]  %s1395, 16, %s1392, %s1382
        $region64: #{tpu_custom_call.1} parent=47 // pred_fallthru
          _
      $region48: #{tpu_custom_call.1} parent=5 // pred_fallthru
        _
      %p1398 = scmp.le.s32.totalorder 2, %s20
      // Predicated region
      $region65: #{tpu_custom_call.1} parent=5 // pred_check
        %p1399 = pneg %p1398
      $region66: #{tpu_custom_call.1} parent=5 // pred_check_branch
        %1401 = sbr.rel (%p1399) target = $region68
      $region67: #{tpu_custom_call.1} parent=5 // pred_region
        %s1402 = ssub.s32 %s20, 2
        // Predicated region
        $region69: #{tpu_custom_call.1} parent=67 // pred_check
          %p1403 = pneg %p201
        $region70: #{tpu_custom_call.1} parent=67 // pred_check_branch
          %1405 = sbr.rel (%p1403) target = $region72
        $region71: #{tpu_custom_call.1} parent=67 // pred_region
          %s1406 = sand.u32 %s186, 1
          %s1407 = scalar_lea.sflag [#allocation4], %s1406
          %s1408 = sand.u32 %s186, 1
          %s1409 = scalar_lea.vmem [#allocation8], %s1408
          %1410 = dma.done %s1407, 16
        $region72: #{tpu_custom_call.1} parent=67 // pred_fallthru
          _
      $region68: #{tpu_custom_call.1} parent=5 // pred_fallthru
        _
    $region6: #{tpu_custom_call.1} parent=1 // loop_footer
      %s24 = sadd.s32 1, %s20
    $region7: #{tpu_custom_call.1} parent=1 // loop_footer_branch
      %19 = sbr.rel target = $region3
    $region8: #{tpu_custom_call.1} parent=1 // loop_exit
      _
    %1411 = vsyncpa [#allocation3], 1
    %s1412 = scalar_lea.sflag [#allocation3], 1
    %1413 = vsyncpa %s1412, 1
    %1414 = vsyncpa [#allocation6], 1
    %1415 = vsyncpa [#allocation4], 1
    %s1416 = scalar_lea.sflag [#allocation4], 1
    %1417 = vsyncpa %s1416, 1

</llo_original>
